<compile_context>
chip_gen: v5e
topology: v5e:2x2
jax: 0.10.0
libtpu: 0.0.40
codegen_flags: <defaults>
</compile_context>

<pallas_src>
import jax
import jax.numpy as jnp
from jax.experimental import pallas as pl
from jax.experimental.pallas import tpu as pltpu

_LANE = 128
_VMEM_BUDGET = 12 * 1024 * 1024  # stay under every chip's default scoped VMEM


def _round_up(x, m):
    return (x + m - 1) // m * m


def _largest_aligned_divisor(dim, limit, align=_LANE):
    """Largest multiple of `align` dividing `dim` (a multiple of align), <= limit."""
    t = max(align, (min(limit, dim) // align) * align)
    while dim % t:
        t -= align
    return t


def _ws_bytes(tm, tn, tk, out_bytes, with_scratch):
    """Estimated double-buffered VMEM working set for one grid step."""
    ws = 2 * (tm * tk * 2)          # x tile (bf16)
    ws += 2 * (tk * tn * 2)         # weight tile (bf16)
    ws += 2 * (tn * 4)              # bias tile (f32)
    ws += 2 * (tm * tn * out_bytes)  # output tile
    if with_scratch:
        ws += tm * tn * 4           # f32 accumulator
    return ws


# --------------------------------------------------------------------------
# Kernels
# --------------------------------------------------------------------------
def _linear_relu_kernel(x_ref, w_ref, b_ref, o_ref):
    # Single-K path: x (tm, K) bf16, w (K, tn) bf16, b (1, tn) f32.
    acc = jnp.dot(x_ref[...], w_ref[...], preferred_element_type=jnp.float32)
    o_ref[...] = jnp.maximum(acc + b_ref[...], 0.0).astype(o_ref.dtype)


def _linear_relu_acc_kernel(x_ref, w_ref, b_ref, o_ref, acc_ref):
    # K-tiled path: f32 accumulator scratch, init at k==0, epilogue at k==last.
    k = pl.program_id(2)

    @pl.when(k == 0)
    def _():
        acc_ref[...] = jnp.zeros_like(acc_ref)

    acc_ref[...] += jnp.dot(x_ref[...], w_ref[...],
                            preferred_element_type=jnp.float32)

    @pl.when(k == pl.num_programs(2) - 1)
    def _():
        o_ref[...] = jnp.maximum(acc_ref[...] + b_ref[...], 0.0).astype(o_ref.dtype)


# --------------------------------------------------------------------------
# Wrapper
# --------------------------------------------------------------------------
def prepare_applier_params(weight, bias):
    """One-time parameter prep (hoisted out of the per-call hot path).

    weight: [H_OUT, H_IN] (PyTorch nn.Linear layout), bias: [H_OUT].
    Returns (w_t, b2d, h_in, h_out): weight transposed to (H_IN, H_OUT),
    cast to bf16 and zero-padded to lane multiples; bias as f32 [1, H_OUT_pad].
    """
    h_out, h_in = weight.shape
    assert bias.shape == (h_out,)
    k_pad = _round_up(h_in, _LANE)
    n_pad = _round_up(h_out, _LANE)
    w_t = jnp.asarray(weight, jnp.bfloat16).T                       # (h_in, h_out)
    w_t = jnp.pad(w_t, ((0, k_pad - h_in), (0, n_pad - h_out)))
    b2d = jnp.pad(jnp.asarray(bias, jnp.float32), (0, n_pad - h_out)).reshape(1, n_pad)
    return w_t, b2d, h_in, h_out


def applier_forward(x, params, *, tile_b=512, tile_n=512, tile_k=1024):
    """Applier(model=nn.Linear, applier=relu) forward.  x: [B, H_IN]."""
    w_t, b2d, h_in, h_out = params
    B, h_in_x = x.shape
    assert h_in_x == h_in
    k_pad, n_pad = w_t.shape
    out_dtype = x.dtype
    out_bytes = jnp.dtype(out_dtype).itemsize

    # ---- batch tile: right-sized (minimal zero-row padding), 16-aligned (bf16)
    nb = -(-B // max(tile_b, 16))
    tm = _round_up(-(-B // nb), 16)
    b_pad = _round_up(B, tm)
    grid_i = b_pad // tm

    # ---- N tile (lane-aligned divisor of the padded width)
    tn = _largest_aligned_divisor(n_pad, tile_n)
    if grid_i == 1 and n_pad // tn == 1 and n_pad % (2 * _LANE) == 0:
        tn = n_pad // 2          # keep >=2 parallel grid steps (v7x: 2 TCs/chip)
    grid_j = n_pad // tn

    # ---- K: single step (no scratch, no k axis) when the reduction fits VMEM
    single_k = (k_pad <= tile_k
                and _ws_bytes(tm, tn, k_pad, out_bytes, False) <= _VMEM_BUDGET)
    if single_k:
        tk = k_pad
    else:
        tk = _largest_aligned_divisor(k_pad, tile_k)
        while tk > _LANE and _ws_bytes(tm, tn, tk, out_bytes, True) > _VMEM_BUDGET:
            tk = _largest_aligned_divisor(k_pad, tk - _LANE)
    grid_k = k_pad // tk

    # ---- pad activations (zero rows/cols contribute nothing; sliced off below)
    x_in = jnp.asarray(x, jnp.bfloat16)
    if (b_pad, k_pad) != (B, h_in):
        x_in = jnp.pad(x_in, ((0, b_pad - B), (0, k_pad - h_in)))

    cost = pl.CostEstimate(
        flops=2 * b_pad * k_pad * n_pad,
        transcendentals=0,
        bytes_accessed=(b_pad * k_pad * 2 + k_pad * n_pad * 2
                        + n_pad * 4 + b_pad * n_pad * out_bytes),
    )
    out_shape = jax.ShapeDtypeStruct((b_pad, n_pad), out_dtype)

    if single_k:
        out = pl.pallas_call(
            _linear_relu_kernel,
            out_shape=out_shape,
            grid_spec=pltpu.PrefetchScalarGridSpec(
                num_scalar_prefetch=0,
                grid=(grid_i, grid_j),
                in_specs=[
                    pl.BlockSpec((tm, tk), lambda i, j: (i, 0)),   # x tile
                    pl.BlockSpec((tk, tn), lambda i, j: (0, j)),   # weight tile
                    pl.BlockSpec((1, tn), lambda i, j: (0, j)),    # bias tile
                ],
                out_specs=pl.BlockSpec((tm, tn), lambda i, j: (i, j)),
            ),
            compiler_params=pltpu.CompilerParams(
                dimension_semantics=("parallel", "parallel")),
            cost_estimate=cost,
        )(x_in, w_t, b2d)
    else:
        out = pl.pallas_call(
            _linear_relu_acc_kernel,
            out_shape=out_shape,
            grid_spec=pltpu.PrefetchScalarGridSpec(
                num_scalar_prefetch=0,
                grid=(grid_i, grid_j, grid_k),
                in_specs=[
                    pl.BlockSpec((tm, tk), lambda i, j, k: (i, k)),  # x tile
                    pl.BlockSpec((tk, tn), lambda i, j, k: (k, j)),  # weight tile
                    pl.BlockSpec((1, tn), lambda i, j, k: (0, j)),   # bias tile
                ],
                out_specs=pl.BlockSpec((tm, tn), lambda i, j, k: (i, j)),
                scratch_shapes=[pltpu.VMEM((tm, tn), jnp.float32)],
            ),
            compiler_params=pltpu.CompilerParams(
                dimension_semantics=("parallel", "parallel", "arbitrary")),
            cost_estimate=cost,
        )(x_in, w_t, b2d)

    return out[:B, :h_out]


def applier_reference(x, weight, bias):
    # Pure-JAX reference of the same instantiation (nn.Linear + relu).
    return jnp.maximum(x @ weight.T + bias, 0.0)


if __name__ == "__main__":
    key = jax.random.PRNGKey(0)
    kx, kw, kb, kx2, kw2, kb2 = jax.random.split(key, 6)

    # ---- test 1: small lane-aligned shapes (single-K fast path) ------------
    B, H_IN, H_OUT = 8, 128, 128
    x = jax.random.normal(kx, (B, H_IN), dtype=jnp.float32)
    weight = jax.random.normal(kw, (H_OUT, H_IN), dtype=jnp.float32) * 0.05
    bias = jax.random.normal(kb, (H_OUT,), dtype=jnp.float32) * 0.05

    params = prepare_applier_params(weight, bias)      # one-time, hoisted
    out = jax.block_until_ready(applier_forward(x, params))
    ref = applier_reference(x, weight, bias)
    assert out.shape == ref.shape
    # bf16 MXU operands -> loosened tolerance vs the pure-f32 reference.
    assert jnp.allclose(out, ref, atol=5e-2, rtol=5e-2), "mismatch (test 1)"

    # ---- test 2: ragged shapes exercising padding + the K-accumulator path --
    B2, H_IN2, H_OUT2 = 40, 200, 160
    x2 = jax.random.normal(kx2, (B2, H_IN2), dtype=jnp.float32)
    weight2 = jax.random.normal(kw2, (H_OUT2, H_IN2), dtype=jnp.float32) * 0.05
    bias2 = jax.random.normal(kb2, (H_OUT2,), dtype=jnp.float32) * 0.05

    params2 = prepare_applier_params(weight2, bias2)
    out2 = jax.block_until_ready(
        applier_forward(x2, params2, tile_b=32, tile_n=128, tile_k=128))
    ref2 = applier_reference(x2, weight2, bias2)
    assert out2.shape == ref2.shape
    assert jnp.allclose(out2, ref2, atol=5e-2, rtol=5e-2), "mismatch (test 2)"

    print("KERNEL_OK")
</pallas_src>

<mosaic_0001>
module attributes {stable_mosaic.version = 11 : i64} {
  func.func @_linear_relu_kernel(%arg0: i32, %arg1: i32, %arg2: memref<16x128xbf16, #tpu.memory_space<vmem>>, %arg3: memref<128x128xbf16, #tpu.memory_space<vmem>>, %arg4: memref<1x128xf32, #tpu.memory_space<vmem>>, %arg5: memref<16x128xf32, #tpu.memory_space<vmem>>) attributes {dimension_semantics = [#tpu.dimension_semantics<parallel>, #tpu.dimension_semantics<parallel>], iteration_bounds = array<i64: 1, 1>, scalar_prefetch = 0 : i64, scratch_operands = 0 : i64, tpu.core_type = #tpu.core_type<tc>, window_params = [{transform_indices = @transform_0, window_bounds = array<i64: 16, 128>}, {transform_indices = @transform_1, window_bounds = array<i64: 128, 128>}, {transform_indices = @transform_2, window_bounds = array<i64: 1, 128>}, {transform_indices = @transform_3, window_bounds = array<i64: 16, 128>}]} {
    %c0 = arith.constant 0 : index
    %c0_0 = arith.constant 0 : index
    %0 = vector.load %arg2[%c0, %c0_0] : memref<16x128xbf16, #tpu.memory_space<vmem>>, vector<16x128xbf16>
    %c0_1 = arith.constant 0 : index
    %c0_2 = arith.constant 0 : index
    %1 = vector.load %arg3[%c0_1, %c0_2] : memref<128x128xbf16, #tpu.memory_space<vmem>>, vector<128x128xbf16>
    %cst = arith.constant dense<0.000000e+00> : vector<16x128xf32>
    %2 = tpu.matmul %0, %1, %cst {dimension_numbers = #tpu.dot_dimension_numbers<[1], [0], [0], [1], [0, 0, 1, 1], [], []>} : vector<16x128xbf16>, vector<128x128xbf16>, vector<16x128xf32> -> vector<16x128xf32>
    %c0_3 = arith.constant 0 : index
    %c0_4 = arith.constant 0 : index
    %3 = vector.load %arg4[%c0_3, %c0_4] : memref<1x128xf32, #tpu.memory_space<vmem>>, vector<1x128xf32>
    %4 = vector.broadcast %3 : vector<1x128xf32> to vector<16x128xf32>
    %5 = arith.addf %2, %4 : vector<16x128xf32>
    %cst_5 = arith.constant 0.000000e+00 : f32
    %6 = vector.broadcast %cst_5 : f32 to vector<16x128xf32>
    %7 = arith.maximumf %5, %6 : vector<16x128xf32>
    %c0_6 = arith.constant 0 : index
    %c0_7 = arith.constant 0 : index
    %8 = vector.load %arg5[%c0_6, %c0_7] : memref<16x128xf32, #tpu.memory_space<vmem>>, vector<16x128xf32>
    tpu.vector_store %arg5[%c0_6, %c0_7], %7 {strides = array<i32>} : memref<16x128xf32, #tpu.memory_space<vmem>>, vector<16x128xf32>,
    return
  }
  func.func @transform_0(%arg0: i32, %arg1: i32) -> (i32, i32) {
    %c0_i32 = arith.constant 0 : i32
    %c0_i32_0 = arith.constant 0 : i32
    return %arg0, %c0_i32 : i32, i32
  }
  func.func @transform_1(%arg0: i32, %arg1: i32) -> (i32, i32) {
    %c0_i32 = arith.constant 0 : i32
    %c0_i32_0 = arith.constant 0 : i32
    return %c0_i32, %arg1 : i32, i32
  }
  func.func @transform_2(%arg0: i32, %arg1: i32) -> (i32, i32) {
    %c0_i32 = arith.constant 0 : i32
    %c0_i32_0 = arith.constant 0 : i32
    return %c0_i32, %arg1 : i32, i32
  }
  func.func @transform_3(%arg0: i32, %arg1: i32) -> (i32, i32) {
    %c0_i32 = arith.constant 0 : i32
    return %arg0, %arg1 : i32, i32
  }
}

</mosaic_0001>

<llo_original>
// kernel: tpu_custom_call.1
$region0: #{tpu_custom_call.1}
  #allocation0 [shape = 'u32[]', space=smem, size = 0x4, offset = 0x4, fixed_abs, tag = 'smem constant byte address 0x4 - core index']
  #allocation1 [shape = 'u32[72,128]{1,0:T(1,128)}', space=vmem, size = 0x9000, scoped, tag = 'internal scratch']
  %s0 = inlined_call_operand.hbm [shape: bf16[16,128], index: 0, kind: input, shape index: {}]
  %s1 = inlined_call_operand.hbm [shape: bf16[128,128], index: 1, kind: input, shape index: {}]
  %s2 = inlined_call_operand.vmem [shape: f32[1,128], index: 2, kind: input, shape index: {}]
  %s3 = inlined_call_operand.hbm [shape: f32[16,128], index: 3, kind: output, shape index: {}]
  %s4 = sld [smem:[#allocation0]]
  $region30: #{tpu_custom_call.1} parent=0
    _
  %s6 = ssub.s32 1, %s4
  %s7 = scalar_select 0, %s6, %s4
  $region1: #{tpu_custom_call.1} parent=0
    #allocation2 [shape = 'u8[4096]{0}', space=vmem, size = 0x1000, scoped, tag = 'input window, operand 0, single buffered']
    #allocation3 [shape = 's32[1]{0}', space=sflag, size = 0x4, scoped, tag = 'scoped memory for tpu_custom_call.1']
    #allocation4 [shape = 's32[1]{0}', space=sflag, size = 0x4, scoped, tag = 'scoped memory for tpu_custom_call.1']
    #allocation5 [shape = 'u8[32768]{0}', space=vmem, size = 0x8000, scoped, tag = 'input window, operand 1, single buffered']
    #allocation6 [shape = 's32[1]{0}', space=sflag, size = 0x4, scoped, tag = 'scoped memory for tpu_custom_call.1']
    #allocation7 [shape = 'u8[8192]{0}', space=vmem, size = 0x2000, scoped, tag = 'output window, operand 0, single buffered']
    %8 = vsyncpa [#allocation3], 0
    %9 = vsyncpa [#allocation6], 0
    %10 = vsyncpa [#allocation4], 0
    // Predicated region
    $region2: #{tpu_custom_call.1} parent=1 // pred_check
      _
    $region3: #{tpu_custom_call.1} parent=1 // pred_check_branch
      %12 = sbr.rel (0) target = $region5
    $region4: #{tpu_custom_call.1} parent=1 // pred_region
      %14 = vsyncadd [#allocation3], 0
      %s15 = sshll.u32 %s0, 4
      %s16 = int_to_ptr.hbm [resolvable:$true] %s15
      %s17 = sshll.u32 [#allocation2], 4
      %s18 = int_to_ptr.vmem [resolvable:$true] %s17
      %23 = dma.hbm_to_vmem [thread:$0]  %s16, 128, %s18, [#allocation3], 64, 64, 4
    $region5: #{tpu_custom_call.1} parent=1 // pred_fallthru
      _
    // Predicated region
    $region6: #{tpu_custom_call.1} parent=1 // pred_check
      _
    $region7: #{tpu_custom_call.1} parent=1 // pred_check_branch
      %25 = sbr.rel (0) target = $region9
    $region8: #{tpu_custom_call.1} parent=1 // pred_region
      %27 = vsyncadd [#allocation6], 0
      %s28 = sshll.u32 %s1, 4
      %s29 = int_to_ptr.hbm [resolvable:$true] %s28
      %s30 = sshll.u32 [#allocation5], 4
      %s31 = int_to_ptr.vmem [resolvable:$true] %s30
      %36 = dma.hbm_to_vmem [thread:$0]  %s29, 1024, %s31, [#allocation6], 64, 64, 4
    $region9: #{tpu_custom_call.1} parent=1 // pred_fallthru
      _
    // Predicated region
    $region10: #{tpu_custom_call.1} parent=1 // pred_check
      _
    $region11: #{tpu_custom_call.1} parent=1 // pred_check_branch
      %38 = sbr.rel (0) target = $region13
    $region12: #{tpu_custom_call.1} parent=1 // pred_region
      _
    $region13: #{tpu_custom_call.1} parent=1 // pred_fallthru
      _
    // Predicated region
    $region14: #{tpu_custom_call.1} parent=1 // pred_check
      _
    $region15: #{tpu_custom_call.1} parent=1 // pred_check_branch
      %40 = sbr.rel (0) target = $region17
    $region16: #{tpu_custom_call.1} parent=1 // pred_region
      %42 = dma.done [#allocation3], 128
    $region17: #{tpu_custom_call.1} parent=1 // pred_fallthru
      _
    // Predicated region
    $region18: #{tpu_custom_call.1} parent=1 // pred_check
      _
    $region19: #{tpu_custom_call.1} parent=1 // pred_check_branch
      %44 = sbr.rel (0) target = $region21
    $region20: #{tpu_custom_call.1} parent=1 // pred_region
      %46 = dma.done [#allocation6], 1024
    $region21: #{tpu_custom_call.1} parent=1 // pred_fallthru
      _
    %v47 = vld [vmem:[#allocation2] sm:$0xf]
    %v48 = vld [vmem:[#allocation2 + $0x4] sm:$0xf]
    %v49 = vld [vmem:[#allocation5] sm:$0xf]
    %v50 = vld [vmem:[#allocation5 + $0x4] sm:$0xf]
    %v51 = vld [vmem:[#allocation5 + $0x8] sm:$0xf]
    %v52 = vld [vmem:[#allocation5 + $0xc] sm:$0xf]
    %v53 = vld [vmem:[#allocation5 + $0x10] sm:$0xf]
    %v54 = vld [vmem:[#allocation5 + $0x14] sm:$0xf]
    %v55 = vld [vmem:[#allocation5 + $0x18] sm:$0xf]
    %v56 = vld [vmem:[#allocation5 + $0x1c] sm:$0xf]
    %v57 = vld [vmem:[#allocation5 + $0x20] sm:$0xf]
    %v58 = vld [vmem:[#allocation5 + $0x24] sm:$0xf]
    %v59 = vld [vmem:[#allocation5 + $0x28] sm:$0xf]
    %v60 = vld [vmem:[#allocation5 + $0x2c] sm:$0xf]
    %v61 = vld [vmem:[#allocation5 + $0x30] sm:$0xf]
    %v62 = vld [vmem:[#allocation5 + $0x34] sm:$0xf]
    %v63 = vld [vmem:[#allocation5 + $0x38] sm:$0xf]
    %v64 = vld [vmem:[#allocation5 + $0x3c] sm:$0xf]
    %v65 = vld [vmem:[%s2] sm:$0x1]
    %v67 = vperm.slane %v65, 0
    %v71 = vunpack.c.l.b16 %v47
    %v72 = vunpack.c.l.b16 %v48
    %v73 = vpack.c.b16 %v72, %v71
    %v91 = vunpack.c.l.b16 %v49
    %v92 = vunpack.c.l.b16 %v50
    %v93 = vunpack.c.l.b16 %v51
    %v94 = vunpack.c.l.b16 %v52
    %v95 = vunpack.c.l.b16 %v53
    %v96 = vunpack.c.l.b16 %v54
    %v97 = vunpack.c.l.b16 %v55
    %v98 = vunpack.c.l.b16 %v56
    %v99 = vunpack.c.l.b16 %v57
    %v100 = vunpack.c.l.b16 %v58
    %v101 = vunpack.c.l.b16 %v59
    %v102 = vunpack.c.l.b16 %v60
    %v103 = vunpack.c.l.b16 %v61
    %v104 = vunpack.c.l.b16 %v62
    %v105 = vunpack.c.l.b16 %v63
    %v106 = vunpack.c.l.b16 %v64
    %v107 = vpack.c.b16 %v92, %v91
    %v108 = vpack.c.b16 %v94, %v93
    %v109 = vpack.c.b16 %v96, %v95
    %v110 = vpack.c.b16 %v98, %v97
    %v111 = vpack.c.b16 %v100, %v99
    %v112 = vpack.c.b16 %v102, %v101
    %v113 = vpack.c.b16 %v104, %v103
    %v114 = vpack.c.b16 %v106, %v105
    %123 = vmatpush.bf16.msra.mxu0 %v114
    %124 = vmatpush.bf16.msra.mxu0 %v113
    %125 = vmatpush.bf16.msra.mxu0 %v112
    %126 = vmatpush.bf16.msra.mxu0 %v111
    %127 = vmatpush.bf16.msra.mxu0 %v110
    %128 = vmatpush.bf16.msra.mxu0 %v109
    %129 = vmatpush.bf16.msra.mxu0 %v108
    %130 = vmatpush.bf16.msra.mxu0 %v107
    %131 = vmatmul.bf16.gmra.mxu0 %v73
    %v132 = vpop.f32.mrf.mxu0
    %v133 = vadd.f32 %v67, %v132
    %v134 = vpop.f32.mrf.mxu0
    %v135 = vadd.f32 %v67, %v134
    %136 = vdwg.mxu0
    %v137 = vmax.f32 %v133, 0.0
    %v138 = vmax.f32 %v135, 0.0
    %139 = vst [vmem:[#allocation7] sm:$0xff] %v137
    %140 = vst [vmem:[#allocation7 + $0x8] sm:$0xff] %v138
    // Predicated region
    $region22: #{tpu_custom_call.1} parent=1 // pred_check
      _
    $region23: #{tpu_custom_call.1} parent=1 // pred_check_branch
      %142 = sbr.rel (0) target = $region25
    $region24: #{tpu_custom_call.1} parent=1 // pred_region
      %144 = vsyncadd [#allocation4], 0
      %s145 = sshll.u32 [#allocation7], 4
      %s146 = int_to_ptr.vmem [resolvable:$true] %s145
      %s147 = sshll.u32 %s3, 4
      %s148 = int_to_ptr.hbm [resolvable:$true] %s147
      %153 = dma.vmem_to_hbm [thread:$0]  %s146, 256, %s148, [#allocation4], 128, 128, 8
    $region25: #{tpu_custom_call.1} parent=1 // pred_fallthru
      _
    // Predicated region
    $region26: #{tpu_custom_call.1} parent=1 // pred_check
      _
    $region27: #{tpu_custom_call.1} parent=1 // pred_check_branch
      %155 = sbr.rel (0) target = $region29
    $region28: #{tpu_custom_call.1} parent=1 // pred_region
      %157 = dma.done [#allocation4], 256
    $region29: #{tpu_custom_call.1} parent=1 // pred_fallthru
      _
    %158 = vsyncpa [#allocation3], 1
    %159 = vsyncpa [#allocation6], 1
    %160 = vsyncpa [#allocation4], 1

</llo_original>
